<compile_context>
chip_gen: v5e
topology: v5e:2x2
jax: 0.10.0
libtpu: 0.0.40
codegen_flags: <defaults>
</compile_context>

<pallas_src>
import math
import functools

import jax
import jax.numpy as jnp
from jax import lax
from jax.experimental import pallas as pl
from jax.experimental.pallas import tpu as pltpu


# ----------------------------------------------------------------------------
# pe buffer construction (mirrors the PyTorch __init__, deterministic)
# ----------------------------------------------------------------------------
def make_pe(d_model: int, max_len: int = 64) -> jnp.ndarray:
    position = jnp.arange(0, max_len, dtype=jnp.float32)[:, None]          # (max_len, 1)
    div_term = jnp.exp(
        jnp.arange(0, d_model, 2, dtype=jnp.float32) * (-math.log(10000.0) / d_model)
    )                                                                      # (d_model/2,)
    pe = jnp.zeros((max_len, d_model), dtype=jnp.float32)
    pe = pe.at[:, 0::2].set(jnp.sin(position * div_term))
    pe = pe.at[:, 1::2].set(jnp.cos(position * div_term))
    # unsqueeze(0).transpose(0, 1)  ->  (max_len, 1, d_model)
    return pe[:, None, :]


# ----------------------------------------------------------------------------
# Kernels
# ----------------------------------------------------------------------------
def _pe_add_kernel(x_ref, pe_ref, o_ref):
    # x_ref: (ts, B, D);  pe_ref: full (S, 1, D), resident in VMEM (fetched once)
    ts = x_ref.shape[0]
    i = pl.program_id(0)
    pe_blk = pe_ref[pl.ds(i * ts, ts), :, :]          # (ts, 1, D)
    o_ref[...] = x_ref[...] + pe_blk                  # broadcast over batch


def _pe_add_dropout_kernel(seed_ref, x_ref, pe_ref, o_ref, *, p):
    ts, B, D = x_ref.shape
    i = pl.program_id(0)
    pe_blk = pe_ref[pl.ds(i * ts, ts), :, :]
    y = x_ref[...] + pe_blk

    # Stateless counter-based RNG: splitmix32 hash of the global element index
    # mixed with the seed.  uint32 all the way -> integer-threshold compare,
    # no shifts on signed values, no int->float conversion.
    seed = seed_ref[0].astype(jnp.uint32)
    row = lax.broadcasted_iota(jnp.uint32, y.shape, 0) + i.astype(jnp.uint32) * jnp.uint32(ts)
    bidx = lax.broadcasted_iota(jnp.uint32, y.shape, 1)
    didx = lax.broadcasted_iota(jnp.uint32, y.shape, 2)
    ctr = (row * jnp.uint32(B) + bidx) * jnp.uint32(D) + didx   # wraps mod 2^32 (fine for hashing)

    h = ctr ^ (seed * jnp.uint32(0x9E3779B9))
    h = (h ^ (h >> 16)) * jnp.uint32(0x7FEB352D)
    h = (h ^ (h >> 15)) * jnp.uint32(0x846CA68B)
    h = h ^ (h >> 16)

    # keep with probability (1 - p): drop iff h < round(p * 2^32)
    thresh = jnp.uint32(min(int(round(p * (2.0 ** 32))), 2 ** 32 - 1))
    keep = h >= thresh
    scale = jnp.float32(1.0 / (1.0 - p))
    o_ref[...] = jnp.where(keep, y * scale, jnp.float32(0.0)).astype(o_ref.dtype)


# ----------------------------------------------------------------------------
# Tile-size heuristic: largest divisor of S (preferring multiples of 8) whose
# x-block is ~<= 2 MiB -> pipelined, double-buffers comfortably inside the
# scoped-VMEM defaults on v5e/v6e/v7x.
# ----------------------------------------------------------------------------
def _pick_tile_s(S, B, D, itemsize, target_bytes=2 * 1024 * 1024):
    rows = max(1, target_bytes // max(1, B * D * itemsize))
    if rows >= S:
        return S
    best_any, best_mult8 = 1, None
    for t in range(1, S + 1):
        if S % t != 0 or t > rows:
            continue
        best_any = max(best_any, t)
        if t % 8 == 0:
            best_mult8 = t if best_mult8 is None else max(best_mult8, t)
    return best_mult8 if best_mult8 is not None else best_any


# ----------------------------------------------------------------------------
# Wrapper
# ----------------------------------------------------------------------------
def positional_encoding(x, pe, *, p=0.1, training=False, seed=0, tile_s=None,
                        donate_x=False):
    """x: (S, B, D); pe: (max_len, 1, D)."""
    S, B, D = x.shape
    pe_s = pe[:S].astype(x.dtype)                     # (S, 1, D), tiny
    itemsize = jnp.dtype(x.dtype).itemsize

    if training and p >= 1.0:                         # degenerate: drop everything
        return jnp.zeros_like(x)
    if training and p <= 0.0:                         # dropout is identity
        training = False

    if tile_s is None:
        tile_s = _pick_tile_s(S, B, D, itemsize)
    assert S % tile_s == 0, "tile_s must divide S"
    grid = (S // tile_s,)

    out_shape = jax.ShapeDtypeStruct((S, B, D), x.dtype)
    cp = pltpu.CompilerParams(
        dimension_semantics=("parallel",),            # independent S-tiles -> both TCs on v7x
        vmem_limit_bytes=32 * 1024 * 1024,
    )

    if not training:
        x_spec = pl.BlockSpec((tile_s, B, D), lambda i: (i, 0, 0))
        pe_spec = pl.BlockSpec((S, 1, D), lambda i: (0, 0, 0))     # resident, DMA'd once
        o_spec = pl.BlockSpec((tile_s, B, D), lambda i: (i, 0, 0))
        kwargs = {}
        if donate_x:
            kwargs["input_output_aliases"] = {0: 0}
        return pl.pallas_call(
            _pe_add_kernel,
            out_shape=out_shape,
            grid_spec=pltpu.PrefetchScalarGridSpec(
                num_scalar_prefetch=0,
                grid=grid,
                in_specs=[x_spec, pe_spec],
                out_specs=o_spec,
            ),
            compiler_params=cp,
            **kwargs,
        )(x, pe_s)

    # Training mode: dropout with a stateless in-kernel hash RNG.
    # TODO(synk): PyTorch's dropout RNG stream cannot be reproduced bit-exactly;
    #             the mask is Bernoulli(1-p) with inverted-scale semantics.
    seed_arr = jnp.asarray([seed], dtype=jnp.int32)
    x_spec = pl.BlockSpec((tile_s, B, D), lambda i, s: (i, 0, 0))
    pe_spec = pl.BlockSpec((S, 1, D), lambda i, s: (0, 0, 0))
    o_spec = pl.BlockSpec((tile_s, B, D), lambda i, s: (i, 0, 0))
    return pl.pallas_call(
        functools.partial(_pe_add_dropout_kernel, p=float(p)),
        out_shape=out_shape,
        grid_spec=pltpu.PrefetchScalarGridSpec(
            num_scalar_prefetch=1,
            grid=grid,
            in_specs=[x_spec, pe_spec],
            out_specs=o_spec,
        ),
        compiler_params=cp,
    )(seed_arr, x, pe_s)


# ----------------------------------------------------------------------------
# Main
# ----------------------------------------------------------------------------
if __name__ == "__main__":
    d_model = 32
    max_len = 64
    seq = 8
    batch = 2
    p = 0.1

    key = jax.random.PRNGKey(0)
    x = jax.random.normal(key, (seq, batch, d_model), dtype=jnp.float32)

    pe = make_pe(d_model, max_len)                    # (max_len, 1, d_model)
    ref = x + pe[:seq]

    # Eval mode (deterministic): dropout is identity -> verify against pure JAX.
    out_eval = jax.block_until_ready(positional_encoding(x, pe, p=p, training=False))
    assert out_eval.shape == (seq, batch, d_model)
    assert jnp.allclose(out_eval, ref, atol=1e-6, rtol=1e-6), "mismatch vs reference"

    # Training mode: exercise the in-kernel dropout path.
    out_train = jax.block_until_ready(
        positional_encoding(x, pe, p=p, training=True, seed=42)
    )
    assert out_train.shape == (seq, batch, d_model)
    # Every element is either dropped (0) or kept-and-scaled by 1/(1-p).
    scaled = ref / (1.0 - p)
    ok = jnp.logical_or(
        jnp.isclose(out_train, 0.0, atol=1e-6),
        jnp.isclose(out_train, scaled, atol=1e-5, rtol=1e-5),
    )
    assert bool(jnp.all(ok)), "dropout output is not {0, (x+pe)/(1-p)}"
    drop_frac = float(jnp.mean((out_train == 0.0).astype(jnp.float32)))
    assert 0.0 < drop_frac < 0.4, f"implausible drop fraction {drop_frac}"

    print("KERNEL_OK")
</pallas_src>

<mosaic_0001>
module attributes {stable_mosaic.version = 11 : i64} {
  func.func @_pe_add_kernel(%arg0: i32, %arg1: memref<8x2x32xf32, #tpu.memory_space<vmem>>, %arg2: memref<8x1x32xf32, #tpu.memory_space<vmem>>, %arg3: memref<8x2x32xf32, #tpu.memory_space<vmem>>) attributes {dimension_semantics = [#tpu.dimension_semantics<parallel>], iteration_bounds = array<i64: 1>, scalar_prefetch = 0 : i64, scratch_operands = 0 : i64, tpu.core_type = #tpu.core_type<tc>, window_params = [{transform_indices = @transform_0, window_bounds = array<i64: 8, 2, 32>}, {pipeline_mode = #tpu.pipeline_mode<synchronous>, transform_indices = @transform_1, window_bounds = array<i64: 8, 1, 32>}, {transform_indices = @transform_2, window_bounds = array<i64: 8, 2, 32>}]} {
    %c8_i32 = arith.constant 8 : i32
    %0 = arith.muli %arg0, %c8_i32 : i32
    %1 = arith.index_cast %0 : i32 to index
    %c0 = arith.constant 0 : index
    %c0_0 = arith.constant 0 : index
    %2 = vector.load %arg2[%1, %c0, %c0_0] : memref<8x1x32xf32, #tpu.memory_space<vmem>>, vector<8x1x32xf32>
    %c0_1 = arith.constant 0 : index
    %c0_2 = arith.constant 0 : index
    %c0_3 = arith.constant 0 : index
    %3 = vector.load %arg1[%c0_1, %c0_2, %c0_3] : memref<8x2x32xf32, #tpu.memory_space<vmem>>, vector<8x2x32xf32>
    %4 = vector.broadcast %2 : vector<8x1x32xf32> to vector<8x2x32xf32>
    %5 = arith.addf %3, %4 : vector<8x2x32xf32>
    %c0_4 = arith.constant 0 : index
    %c0_5 = arith.constant 0 : index
    %c0_6 = arith.constant 0 : index
    %6 = vector.load %arg3[%c0_4, %c0_5, %c0_6] : memref<8x2x32xf32, #tpu.memory_space<vmem>>, vector<8x2x32xf32>
    tpu.vector_store %arg3[%c0_4, %c0_5, %c0_6], %5 {strides = array<i32>} : memref<8x2x32xf32, #tpu.memory_space<vmem>>, vector<8x2x32xf32>,
    return
  }
  func.func @transform_0(%arg0: i32) -> (i32, i32, i32) {
    %c0_i32 = arith.constant 0 : i32
    %c0_i32_0 = arith.constant 0 : i32
    %c0_i32_1 = arith.constant 0 : i32
    return %arg0, %c0_i32, %c0_i32_0 : i32, i32, i32
  }
  func.func @transform_1(%arg0: i32) -> (i32, i32, i32) {
    %c0_i32 = arith.constant 0 : i32
    %c0_i32_0 = arith.constant 0 : i32
    %c0_i32_1 = arith.constant 0 : i32
    %c0_i32_2 = arith.constant 0 : i32
    return %c0_i32, %c0_i32_0, %c0_i32_1 : i32, i32, i32
  }
  func.func @transform_2(%arg0: i32) -> (i32, i32, i32) {
    %c0_i32 = arith.constant 0 : i32
    %c0_i32_0 = arith.constant 0 : i32
    %c0_i32_1 = arith.constant 0 : i32
    return %arg0, %c0_i32, %c0_i32_0 : i32, i32, i32
  }
}

</mosaic_0001>

<llo_original>
// kernel: tpu_custom_call.1
$region0: #{tpu_custom_call.1}
  #allocation0 [shape = 'u32[]', space=smem, size = 0x4, offset = 0x4, fixed_abs, tag = 'smem constant byte address 0x4 - core index']
  #allocation1 [shape = 'u32[72,128]{1,0:T(1,128)}', space=vmem, size = 0x9000, scoped, tag = 'internal scratch']
  %s0 = inlined_call_operand.hbm [shape: f32[8,2,32], index: 0, kind: input, shape index: {}]
  %s1 = inlined_call_operand.hbm [shape: f32[8,1,32], index: 1, kind: input, shape index: {}]
  %s2 = inlined_call_operand.hbm [shape: f32[8,2,32], index: 2, kind: output, shape index: {}]
  %s3 = sld [smem:[#allocation0]]
  $region26: #{tpu_custom_call.1} parent=0
    _
  %s5 = ssub.s32 1, %s3
  %s6 = scalar_select 0, %s5, %s3
  $region1: #{tpu_custom_call.1} parent=0
    #allocation2 [shape = 'u8[8192]{0}', space=vmem, size = 0x2000, scoped, tag = 'input window, operand 0, single buffered']
    #allocation3 [shape = 's32[1]{0}', space=sflag, size = 0x4, scoped, tag = 'scoped memory for tpu_custom_call.1']
    #allocation4 [shape = 's32[1]{0}', space=sflag, size = 0x4, scoped, tag = 'scoped memory for tpu_custom_call.1']
    #allocation5 [shape = 'u8[4096]{0}', space=vmem, size = 0x1000, scoped, tag = 'input window, operand 1, single buffered']
    #allocation6 [shape = 's32[1]{0}', space=sflag, size = 0x4, scoped, tag = 'scoped memory for tpu_custom_call.1']
    #allocation7 [shape = 'u8[8192]{0}', space=vmem, size = 0x2000, scoped, tag = 'output window, operand 0, single buffered']
    %7 = vsyncpa [#allocation3], 0
    %8 = vsyncpa [#allocation6], 0
    %9 = vsyncpa [#allocation4], 0
    // Predicated region
    $region2: #{tpu_custom_call.1} parent=1 // pred_check
      _
    $region3: #{tpu_custom_call.1} parent=1 // pred_check_branch
      %11 = sbr.rel (0) target = $region5
    $region4: #{tpu_custom_call.1} parent=1 // pred_region
      %13 = vsyncadd [#allocation3], 0
      %s14 = sshll.u32 %s0, 4
      %s15 = int_to_ptr.hbm [resolvable:$true] %s14
      %s16 = sshll.u32 [#allocation2], 4
      %s17 = int_to_ptr.vmem [resolvable:$true] %s16
      %22 = dma.hbm_to_vmem [thread:$0]  %s15, 256, %s17, [#allocation3], 32, 32, 2
    $region5: #{tpu_custom_call.1} parent=1 // pred_fallthru
      _
    // Predicated region
    $region6: #{tpu_custom_call.1} parent=1 // pred_check
      _
    $region7: #{tpu_custom_call.1} parent=1 // pred_check_branch
      %24 = sbr.rel (0) target = $region9
    $region8: #{tpu_custom_call.1} parent=1 // pred_region
      %26 = vsyncadd [#allocation6], 0
      %s27 = sshll.u32 %s1, 4
      %s28 = int_to_ptr.hbm [resolvable:$true] %s27
      %s29 = sshll.u32 [#allocation5], 4
      %s30 = int_to_ptr.vmem [resolvable:$true] %s29
      %35 = dma.hbm_to_vmem [thread:$0]  %s28, 128, %s30, [#allocation6], 16, 16, 1
    $region9: #{tpu_custom_call.1} parent=1 // pred_fallthru
      _
    // Predicated region
    $region10: #{tpu_custom_call.1} parent=1 // pred_check
      _
    $region11: #{tpu_custom_call.1} parent=1 // pred_check_branch
      %37 = sbr.rel (0) target = $region13
    $region12: #{tpu_custom_call.1} parent=1 // pred_region
      %39 = dma.done [#allocation3], 256
    $region13: #{tpu_custom_call.1} parent=1 // pred_fallthru
      _
    // Predicated region
    $region14: #{tpu_custom_call.1} parent=1 // pred_check
      _
    $region15: #{tpu_custom_call.1} parent=1 // pred_check_branch
      %41 = sbr.rel (0) target = $region17
    $region16: #{tpu_custom_call.1} parent=1 // pred_region
      %43 = dma.done [#allocation6], 128
    $region17: #{tpu_custom_call.1} parent=1 // pred_fallthru
      _
    %s44 = smul.u32 0, 8
    %s45 = scalar_lea.vmem [#allocation5], %s44
    %v46 = vld [vmem:[%s45] sm:$0x1]
    %v47 = vld [vmem:[%s45 + $0x1] sm:$0x1]
    %v48 = vld [vmem:[%s45 + $0x2] sm:$0x1]
    %v49 = vld [vmem:[%s45 + $0x3] sm:$0x1]
    %v50 = vld [vmem:[%s45 + $0x4] sm:$0x1]
    %v51 = vld [vmem:[%s45 + $0x5] sm:$0x1]
    %v52 = vld [vmem:[%s45 + $0x6] sm:$0x1]
    %v53 = vld [vmem:[%s45 + $0x7] sm:$0x1]
    %v54 = vld [vmem:[#allocation2] sm:$0x3]
    %v55 = vld [vmem:[#allocation2 + $0x2] sm:$0x3]
    %v56 = vld [vmem:[#allocation2 + $0x4] sm:$0x3]
    %v57 = vld [vmem:[#allocation2 + $0x6] sm:$0x3]
    %v58 = vld [vmem:[#allocation2 + $0x8] sm:$0x3]
    %v59 = vld [vmem:[#allocation2 + $0xa] sm:$0x3]
    %v60 = vld [vmem:[#allocation2 + $0xc] sm:$0x3]
    %v61 = vld [vmem:[#allocation2 + $0xe] sm:$0x3]
    %v70 = vperm.slane %v46, 0
    %v71 = vperm.slane %v47, 0
    %v72 = vperm.slane %v48, 0
    %v73 = vperm.slane %v49, 0
    %v74 = vperm.slane %v50, 0
    %v75 = vperm.slane %v51, 0
    %v76 = vperm.slane %v52, 0
    %v77 = vperm.slane %v53, 0
    %v86 = vadd.f32 %v54, %v70
    %v87 = vadd.f32 %v55, %v71
    %v88 = vadd.f32 %v56, %v72
    %v89 = vadd.f32 %v57, %v73
    %v90 = vadd.f32 %v58, %v74
    %v91 = vadd.f32 %v59, %v75
    %v92 = vadd.f32 %v60, %v76
    %v93 = vadd.f32 %v61, %v77
    %vm94 = vcmask 254976
    %95 = vst.msk [vmem:[#allocation7] sm:$0x3] %vm94, %v86
    %96 = vst.msk [vmem:[#allocation7 + $0x2] sm:$0x3] %vm94, %v87
    %97 = vst.msk [vmem:[#allocation7 + $0x4] sm:$0x3] %vm94, %v88
    %98 = vst.msk [vmem:[#allocation7 + $0x6] sm:$0x3] %vm94, %v89
    %99 = vst.msk [vmem:[#allocation7 + $0x8] sm:$0x3] %vm94, %v90
    %100 = vst.msk [vmem:[#allocation7 + $0xa] sm:$0x3] %vm94, %v91
    %101 = vst.msk [vmem:[#allocation7 + $0xc] sm:$0x3] %vm94, %v92
    %102 = vst.msk [vmem:[#allocation7 + $0xe] sm:$0x3] %vm94, %v93
    // Predicated region
    $region18: #{tpu_custom_call.1} parent=1 // pred_check
      _
    $region19: #{tpu_custom_call.1} parent=1 // pred_check_branch
      %104 = sbr.rel (0) target = $region21
    $region20: #{tpu_custom_call.1} parent=1 // pred_region
      %106 = vsyncadd [#allocation4], 0
      %s107 = sshll.u32 [#allocation7], 4
      %s108 = int_to_ptr.vmem [resolvable:$true] %s107
      %s109 = sshll.u32 %s2, 4
      %s110 = int_to_ptr.hbm [resolvable:$true] %s109
      %115 = dma.vmem_to_hbm [thread:$0]  %s108, 256, %s110, [#allocation4], 32, 32, 2
    $region21: #{tpu_custom_call.1} parent=1 // pred_fallthru
      _
    // Predicated region
    $region22: #{tpu_custom_call.1} parent=1 // pred_check
      _
    $region23: #{tpu_custom_call.1} parent=1 // pred_check_branch
      %117 = sbr.rel (0) target = $region25
    $region24: #{tpu_custom_call.1} parent=1 // pred_region
      %119 = dma.done [#allocation4], 256
    $region25: #{tpu_custom_call.1} parent=1 // pred_fallthru
      _
    %120 = vsyncpa [#allocation3], 1
    %121 = vsyncpa [#allocation6], 1
    %122 = vsyncpa [#allocation4], 1

</llo_original>
